<compile_context>
chip_gen: v7x
topology: tpu7x:2x2x1
jax: 0.10.0
libtpu: 0.0.40
codegen_flags: <defaults>
</compile_context>

<pallas_src>
import math
import functools

import jax
import jax.numpy as jnp
from jax.experimental import pallas as pl
from jax.experimental.pallas import tpu as pltpu

_LANE = 128      # lane width (last dim)
_SUBLANE = 8     # sublane width (second-to-last dim)


def _round_up(x, m):
    return ((x + m - 1) // m) * m


def _vmem_plan():
    """Per-generation scoped-VMEM limit and tile budget (bytes)."""
    try:
        cap = int(pltpu.get_tpu_info().vmem_capacity_bytes)
    except Exception:
        cap = 64 * 1024 * 1024                 # conservative: v7x-sized
    limit = min(cap * 3 // 4, 96 * 1024 * 1024)   # 96 MiB on 128-MiB parts, 48 MiB on v7x
    budget = limit * 3 // 4                        # headroom for compiler scratch
    return budget, limit


def _siren_kernel(x_ref, wt_ref, b_ref, o_ref, *, w0):
    # x_ref : (tm, dim_in)   activation row tile (unpadded K)
    # wt_ref: (dim_in, tn)   pre-transposed weight tile
    # b_ref : (1, tn)        bias row (f32)
    # o_ref : (tm, tn)       output tile
    acc = jnp.dot(x_ref[...], wt_ref[...], preferred_element_type=jnp.float32)
    acc = acc + b_ref[...]                         # f32 bias add, broadcast over rows
    if w0 != 1.0:                                  # usually folded into params -> skipped
        acc = acc * jnp.float32(w0)
    o_ref[...] = jnp.sin(acc).astype(o_ref.dtype)


def prepare_siren_params(weight, bias=None, *, w0=1.0, fold_w0=True, param_dtype=None):
    """One-time parameter prep, hoisted out of the per-call path.

    weight: (dim_out, dim_in); bias: (dim_out,) or None.
    Returns the transposed weight (dim_in, dim_out_p), lane-padded ONLY along dim_out,
    an f32 bias row (1, dim_out_p), and the residual w0 scale (1.0 if folded).
    param_dtype=jnp.bfloat16 halves streamed weight/activation bytes; w0 is folded in
    f32 before any down-cast and the kernel keeps an f32 accumulate + epilogue.
    """
    dim_out, dim_in = weight.shape
    dout_p = _round_up(dim_out, _LANE)
    param_dtype = weight.dtype if param_dtype is None else jnp.dtype(param_dtype)

    wt = weight.T.astype(jnp.float32)                          # (dim_in, dim_out) f32
    b = bias if bias is not None else jnp.zeros((dim_out,), jnp.float32)
    b = b.astype(jnp.float32)
    if fold_w0:
        wt = wt * jnp.float32(w0)
        b = b * jnp.float32(w0)
        w0_rem = 1.0
    else:
        w0_rem = float(w0)

    wt_p = jnp.zeros((dim_in, dout_p), param_dtype).at[:, :dim_out].set(
        wt.astype(param_dtype))
    b_p = jnp.zeros((1, dout_p), jnp.float32).at[0, :dim_out].set(b)
    return dict(wt=wt_p, b=b_p, w0=w0_rem, dim_in=dim_in, dim_out=dim_out)


def siren_forward(x, params, *, tm=None, tn=None, out_dtype=None, unpad=True):
    """x: (..., dim_in) -> (..., dim_out) with sin(w0 * (x @ W^T + b))."""
    wt_p, b_p, w0 = params["wt"], params["b"], params["w0"]
    dim_in, dim_out = params["dim_in"], params["dim_out"]
    dout_p = wt_p.shape[1]
    assert x.shape[-1] == dim_in

    lead = x.shape[:-1]
    batch = int(math.prod(lead)) if lead else 1
    out_dtype = jnp.dtype(x.dtype if out_dtype is None else out_dtype)

    # Stream activations in the parameter dtype (bf16 params => bf16 x stream).
    x2 = x.reshape(batch, dim_in)
    if x2.dtype != wt_p.dtype:
        x2 = x2.astype(wt_p.dtype)

    xb = jnp.dtype(x2.dtype).itemsize
    wb = jnp.dtype(wt_p.dtype).itemsize
    ob = out_dtype.itemsize

    budget, vmem_limit = _vmem_plan()

    # ---- column tile: keep the whole weight resident when it comfortably fits ----
    if tn is None:
        if dim_in * dout_p * wb <= budget // 4:
            tn = dout_p
        else:
            tn = next(c for c in (512, 256, 128) if dout_p % c == 0)
    assert dout_p % tn == 0 and tn % _LANE == 0
    n_col = dout_p // tn
    w_bufs = 1 if n_col == 1 else 2                 # resident weight: single buffer

    # ---- row tile: as large as the budget allows; >= 2 row steps for megacore ----
    def fits(tm_):
        return (2 * tm_ * dim_in * xb                        # x tile (double buffered)
                + w_bufs * (dim_in * tn * wb + tn * 4)       # weight + bias
                + 2 * tm_ * tn * ob                          # out tile (double buffered)
                + tm_ * tn * 4) <= budget                    # f32 pre-cast result

    if tm is None:
        tm = 2048
    tm = max(_SUBLANE, min(_round_up(tm, _SUBLANE), _round_up(batch, _SUBLANE), 4096))
    while tm > _SUBLANE and not fits(tm):
        tm = max(_SUBLANE, _round_up(tm // 2, _SUBLANE))
    while tm > _SUBLANE and pl.cdiv(batch, tm) < 2:          # keep both v7x cores busy
        tm = max(_SUBLANE, _round_up(tm // 2, _SUBLANE))
    n_row = pl.cdiv(batch, tm)

    cost = pl.CostEstimate(
        flops=2 * batch * dim_in * dout_p,
        transcendentals=batch * dout_p,
        bytes_accessed=(batch * dim_in * xb
                        + (1 if n_col == 1 else n_row) * dim_in * dout_p * wb
                        + dout_p * 4
                        + batch * dout_p * ob),
    )

    kernel = functools.partial(_siren_kernel, w0=float(w0))

    def build(single_buffer_resident):
        res = dict(pipeline_mode=pl.Buffered(1)) if single_buffer_resident else {}
        return pl.pallas_call(
            kernel,
            out_shape=jax.ShapeDtypeStruct((batch, dout_p), out_dtype),
            grid_spec=pltpu.PrefetchScalarGridSpec(
                num_scalar_prefetch=0,
                grid=(n_row, n_col),
                in_specs=[
                    pl.BlockSpec((tm, dim_in), lambda i, j: (i, 0)),
                    pl.BlockSpec((dim_in, tn), lambda i, j: (0, j), **res),
                    pl.BlockSpec((1, tn), lambda i, j: (0, j), **res),
                ],
                out_specs=pl.BlockSpec((tm, tn), lambda i, j: (i, j)),
            ),
            compiler_params=pltpu.CompilerParams(
                dimension_semantics=("parallel", "parallel"),
                vmem_limit_bytes=vmem_limit,
            ),
            cost_estimate=cost,
        )

    single = (n_col == 1)
    try:
        out_p = build(single)(x2, wt_p, b_p)
    except Exception:
        if not single:
            raise
        out_p = build(False)(x2, wt_p, b_p)        # fallback: default double buffering

    out = out_p[:, :dim_out] if (unpad and dout_p != dim_out) else out_p
    return out.reshape(*lead, out.shape[-1])


def init_siren_params(key, dim_in, dim_out, *, c=6.0, w0=1.0, dtype=jnp.float32):
    """Deterministic SIREN init (matches init_ in the PyTorch module)."""
    kw, kb = jax.random.split(key)
    std = 1.0 / math.sqrt(dim_in)
    w_std = math.sqrt(c) * std / w0
    weight = jax.random.uniform(kw, (dim_out, dim_in), dtype, minval=-w_std, maxval=w_std)
    bias = jax.random.uniform(kb, (dim_out,), dtype, minval=-std, maxval=std)
    return weight, bias


if __name__ == "__main__":
    key = jax.random.PRNGKey(0)
    k_x1, k_p1, k_x2, k_p2, k_x3, k_p3 = jax.random.split(key, 6)

    # --- 1. small demo matching the PyTorch module defaults ----------------------
    batch, dim_in, dim_out, w0 = 8, 32, 32, 1.0
    x = jax.random.normal(k_x1, (batch, dim_in), jnp.float32)
    w, b = init_siren_params(k_p1, dim_in, dim_out, c=6.0, w0=w0)
    params = prepare_siren_params(w, b, w0=w0, fold_w0=True)
    out = jax.block_until_ready(siren_forward(x, params))
    ref = jnp.sin(w0 * (x @ w.T + b))
    assert out.shape == (batch, dim_out)
    assert jnp.allclose(out, ref, atol=1e-5, rtol=1e-5), \
        float(jnp.max(jnp.abs(out - ref)))

    # --- 2. ragged batch, unpadded dim_in, non-lane dim_out, w0 != 1 path --------
    batch2, dim_in2, dim_out2, w02 = 1000, 64, 200, 30.0
    x2 = jax.random.normal(k_x2, (batch2, dim_in2), jnp.float32)
    w2, b2 = init_siren_params(k_p2, dim_in2, dim_out2, c=6.0, w0=w02)
    params2 = prepare_siren_params(w2, b2, w0=w02, fold_w0=False)
    out2 = jax.block_until_ready(siren_forward(x2, params2))
    ref2 = jnp.sin(w02 * (x2 @ w2.T + b2))
    assert out2.shape == (batch2, dim_out2)
    assert jnp.allclose(out2, ref2, atol=2e-3, rtol=2e-3), \
        float(jnp.max(jnp.abs(out2 - ref2)))

    # --- 3. bf16-streamed params, tiled dim_out (multi-step column grid) ---------
    batch3, dim_in3, dim_out3, w03 = 300, 128, 640, 1.0
    x3 = jax.random.normal(k_x3, (batch3, dim_in3), jnp.float32)
    w3, b3 = init_siren_params(k_p3, dim_in3, dim_out3, c=6.0, w0=w03)
    params3 = prepare_siren_params(w3, b3, w0=w03, fold_w0=True,
                                   param_dtype=jnp.bfloat16)
    out3 = jax.block_until_ready(
        siren_forward(x3, params3, tn=128, out_dtype=jnp.float32))
    ref3 = jnp.sin(w03 * (x3 @ w3.T + b3))
    assert out3.shape == (batch3, dim_out3)
    assert jnp.allclose(out3, ref3, atol=3e-2, rtol=3e-2), \
        float(jnp.max(jnp.abs(out3 - ref3)))

    print("KERNEL_OK")
</pallas_src>

<mosaic_0001>
module attributes {stable_mosaic.version = 11 : i64} {
  func.func @_siren_kernel(%arg0: i32, %arg1: i32, %arg2: memref<8x32xf32, #tpu.memory_space<vmem>>, %arg3: memref<32x128xf32, #tpu.memory_space<vmem>>, %arg4: memref<1x128xf32, #tpu.memory_space<vmem>>, %arg5: memref<8x128xf32, #tpu.memory_space<vmem>>) attributes {dimension_semantics = [#tpu.dimension_semantics<parallel>, #tpu.dimension_semantics<parallel>], iteration_bounds = array<i64: 1, 1>, scalar_prefetch = 0 : i64, scratch_operands = 0 : i64, tpu.core_type = #tpu.core_type<tc>, window_params = [{transform_indices = @transform_0, window_bounds = array<i64: 8, 32>}, {pipeline_mode = #tpu.pipeline_mode<synchronous>, transform_indices = @transform_1, window_bounds = array<i64: 32, 128>}, {pipeline_mode = #tpu.pipeline_mode<synchronous>, transform_indices = @transform_2, window_bounds = array<i64: 1, 128>}, {transform_indices = @transform_3, window_bounds = array<i64: 8, 128>}]} {
    %c0 = arith.constant 0 : index
    %c0_0 = arith.constant 0 : index
    %0 = vector.load %arg2[%c0, %c0_0] : memref<8x32xf32, #tpu.memory_space<vmem>>, vector<8x32xf32>
    %c0_1 = arith.constant 0 : index
    %c0_2 = arith.constant 0 : index
    %1 = vector.load %arg3[%c0_1, %c0_2] : memref<32x128xf32, #tpu.memory_space<vmem>>, vector<32x128xf32>
    %cst = arith.constant dense<0.000000e+00> : vector<8x128xf32>
    %2 = tpu.matmul %0, %1, %cst {dimension_numbers = #tpu.dot_dimension_numbers<[1], [0], [0], [1], [0, 0, 1, 1], [], []>} : vector<8x32xf32>, vector<32x128xf32>, vector<8x128xf32> -> vector<8x128xf32>
    %c0_3 = arith.constant 0 : index
    %c0_4 = arith.constant 0 : index
    %3 = vector.load %arg4[%c0_3, %c0_4] : memref<1x128xf32, #tpu.memory_space<vmem>>, vector<1x128xf32>
    %4 = vector.broadcast %3 : vector<1x128xf32> to vector<8x128xf32>
    %5 = arith.addf %2, %4 : vector<8x128xf32>
    %6 = math.sin %5 : vector<8x128xf32>
    %c0_5 = arith.constant 0 : index
    %c0_6 = arith.constant 0 : index
    %7 = vector.load %arg5[%c0_5, %c0_6] : memref<8x128xf32, #tpu.memory_space<vmem>>, vector<8x128xf32>
    tpu.vector_store %arg5[%c0_5, %c0_6], %6 {strides = array<i32>} : memref<8x128xf32, #tpu.memory_space<vmem>>, vector<8x128xf32>,
    return
  }
  func.func @transform_0(%arg0: i32, %arg1: i32) -> (i32, i32) {
    %c0_i32 = arith.constant 0 : i32
    %c0_i32_0 = arith.constant 0 : i32
    return %arg0, %c0_i32 : i32, i32
  }
  func.func @transform_1(%arg0: i32, %arg1: i32) -> (i32, i32) {
    %c0_i32 = arith.constant 0 : i32
    %c0_i32_0 = arith.constant 0 : i32
    return %c0_i32, %arg1 : i32, i32
  }
  func.func @transform_2(%arg0: i32, %arg1: i32) -> (i32, i32) {
    %c0_i32 = arith.constant 0 : i32
    %c0_i32_0 = arith.constant 0 : i32
    return %c0_i32, %arg1 : i32, i32
  }
  func.func @transform_3(%arg0: i32, %arg1: i32) -> (i32, i32) {
    %c0_i32 = arith.constant 0 : i32
    return %arg0, %arg1 : i32, i32
  }
}

module attributes {stable_mosaic.version = 11 : i64} {
  func.func @_siren_kernel(%arg0: i32, %arg1: i32, %arg2: memref<8x32xf32, #tpu.memory_space<vmem>>, %arg3: memref<32x128xf32, #tpu.memory_space<vmem>>, %arg4: memref<1x128xf32, #tpu.memory_space<vmem>>, %arg5: memref<8x128xf32, #tpu.memory_space<vmem>>) attributes {dimension_semantics = [#tpu.dimension_semantics<parallel>, #tpu.dimension_semantics<parallel>], iteration_bounds = array<i64: 1, 1>, scalar_prefetch = 0 : i64, scratch_operands = 0 : i64, tpu.core_type = #tpu.core_type<tc>, window_params = [{transform_indices = @transform_0, window_bounds = array<i64: 8, 32>}, {transform_indices = @transform_1, window_bounds = array<i64: 32, 128>}, {transform_indices = @transform_2, window_bounds = array<i64: 1, 128>}, {transform_indices = @transform_3, window_bounds = array<i64: 8, 128>}]} {
    %c0 = arith.constant 0 : index
    %c0_0 = arith.constant 0 : index
    %0 = vector.load %arg2[%c0, %c0_0] : memref<8x32xf32, #tpu.memory_space<vmem>>, vector<8x32xf32>
    %c0_1 = arith.constant 0 : index
    %c0_2 = arith.constant 0 : index
    %1 = vector.load %arg3[%c0_1, %c0_2] : memref<32x128xf32, #tpu.memory_space<vmem>>, vector<32x128xf32>
    %cst = arith.constant dense<0.000000e+00> : vector<8x128xf32>
    %2 = tpu.matmul %0, %1, %cst {dimension_numbers = #tpu.dot_dimension_numbers<[1], [0], [0], [1], [0, 0, 1, 1], [], []>} : vector<8x32xf32>, vector<32x128xf32>, vector<8x128xf32> -> vector<8x128xf32>
    %c0_3 = arith.constant 0 : index
    %c0_4 = arith.constant 0 : index
    %3 = vector.load %arg4[%c0_3, %c0_4] : memref<1x128xf32, #tpu.memory_space<vmem>>, vector<1x128xf32>
    %4 = vector.broadcast %3 : vector<1x128xf32> to vector<8x128xf32>
    %5 = arith.addf %2, %4 : vector<8x128xf32>
    %6 = math.sin %5 : vector<8x128xf32>
    %c0_5 = arith.constant 0 : index
    %c0_6 = arith.constant 0 : index
    %7 = vector.load %arg5[%c0_5, %c0_6] : memref<8x128xf32, #tpu.memory_space<vmem>>, vector<8x128xf32>
    tpu.vector_store %arg5[%c0_5, %c0_6], %6 {strides = array<i32>} : memref<8x128xf32, #tpu.memory_space<vmem>>, vector<8x128xf32>,
    return
  }
  func.func @transform_0(%arg0: i32, %arg1: i32) -> (i32, i32) {
    %c0_i32 = arith.constant 0 : i32
    %c0_i32_0 = arith.constant 0 : i32
    return %arg0, %c0_i32 : i32, i32
  }
  func.func @transform_1(%arg0: i32, %arg1: i32) -> (i32, i32) {
    %c0_i32 = arith.constant 0 : i32
    %c0_i32_0 = arith.constant 0 : i32
    return %c0_i32, %arg1 : i32, i32
  }
  func.func @transform_2(%arg0: i32, %arg1: i32) -> (i32, i32) {
    %c0_i32 = arith.constant 0 : i32
    %c0_i32_0 = arith.constant 0 : i32
    return %c0_i32, %arg1 : i32, i32
  }
  func.func @transform_3(%arg0: i32, %arg1: i32) -> (i32, i32) {
    %c0_i32 = arith.constant 0 : i32
    return %arg0, %arg1 : i32, i32
  }
}

</mosaic_0001>

<llo_original>
// kernel: tpu_custom_call.1
$region0: #{tpu_custom_call.1}
  #allocation0 [shape = 'u32[]', space=smem, size = 0x4, offset = 0x4, fixed_abs, tag = 'smem constant byte address 0x4 - core index']
  #allocation1 [shape = 'u32[144,128]{1,0:T(1,128)}', space=vmem, size = 0x12000, scoped, tag = 'internal scratch']
  %s0 = inlined_call_operand.hbm [shape: f32[8,32], index: 0, kind: input, shape index: {}]
  %s1 = inlined_call_operand.hbm [shape: f32[32,128], index: 1, kind: input, shape index: {}]
  %s2 = inlined_call_operand.vmem [shape: f32[1,128], index: 2, kind: input, shape index: {}]
  %s3 = inlined_call_operand.hbm [shape: f32[8,128], index: 3, kind: output, shape index: {}]
  %s4 = sld [smem:[#allocation0]]
  $region30: #{tpu_custom_call.1} parent=0
    _
  %s6 = ssub.s32 1, %s4
  %s7 = scalar_select 0, %s6, %s4
  $region1: #{tpu_custom_call.1} parent=0
    #allocation2 [shape = 'u8[4096]{0}', space=vmem, size = 0x1000, scoped, tag = 'input window, operand 0, single buffered']
    #allocation3 [shape = 's32[1]{0}', space=sflag, size = 0x4, scoped, tag = 'scoped memory for tpu_custom_call.1']
    #allocation4 [shape = 's32[1]{0}', space=sflag, size = 0x4, scoped, tag = 'scoped memory for tpu_custom_call.1']
    #allocation5 [shape = 'u8[16384]{0}', space=vmem, size = 0x4000, scoped, tag = 'input window, operand 1, single buffered']
    #allocation6 [shape = 's32[1]{0}', space=sflag, size = 0x4, scoped, tag = 'scoped memory for tpu_custom_call.1']
    #allocation7 [shape = 'u8[4096]{0}', space=vmem, size = 0x1000, scoped, tag = 'output window, operand 0, single buffered']
    %8 = vsyncpa [#allocation3], 0
    %9 = vsyncpa [#allocation6], 0
    %10 = vsyncpa [#allocation4], 0
    // Predicated region
    $region2: #{tpu_custom_call.1} parent=1 // pred_check
      _
    $region3: #{tpu_custom_call.1} parent=1 // pred_check_branch
      %12 = sbr.rel (0) target = $region5
    $region4: #{tpu_custom_call.1} parent=1 // pred_region
      %s14 = ssub.s32 128, 128
      %15 = vsyncadd [#allocation3], %s14
      %s17 = sshll.u32 [#allocation2], 4
      %s18 = int_to_ptr.vmem [resolvable:$true] %s17
      %20 = dma.hbm_to_vmem [thread:$0]  %s0, 128, %s18, [#allocation3]
    $region5: #{tpu_custom_call.1} parent=1 // pred_fallthru
      _
    // Predicated region
    $region6: #{tpu_custom_call.1} parent=1 // pred_check
      _
    $region7: #{tpu_custom_call.1} parent=1 // pred_check_branch
      %22 = sbr.rel (0) target = $region9
    $region8: #{tpu_custom_call.1} parent=1 // pred_region
      %s24 = ssub.s32 512, 512
      %25 = vsyncadd [#allocation6], %s24
      %s26 = sshll.u32 [#allocation5], 4
      %s27 = int_to_ptr.vmem [resolvable:$true] %s26
      %32 = dma.hbm_to_vmem [thread:$0]  %s1, 512, %s27, [#allocation6], 128, 128, 8
    $region9: #{tpu_custom_call.1} parent=1 // pred_fallthru
      _
    // Predicated region
    $region10: #{tpu_custom_call.1} parent=1 // pred_check
      _
    $region11: #{tpu_custom_call.1} parent=1 // pred_check_branch
      %34 = sbr.rel (0) target = $region13
    $region12: #{tpu_custom_call.1} parent=1 // pred_region
      _
    $region13: #{tpu_custom_call.1} parent=1 // pred_fallthru
      _
    // Predicated region
    $region14: #{tpu_custom_call.1} parent=1 // pred_check
      _
    $region15: #{tpu_custom_call.1} parent=1 // pred_check_branch
      %36 = sbr.rel (0) target = $region17
    $region16: #{tpu_custom_call.1} parent=1 // pred_region
      %37 = dma.done [#allocation3], 128
    $region17: #{tpu_custom_call.1} parent=1 // pred_fallthru
      _
    // Predicated region
    $region18: #{tpu_custom_call.1} parent=1 // pred_check
      _
    $region19: #{tpu_custom_call.1} parent=1 // pred_check_branch
      %39 = sbr.rel (0) target = $region21
    $region20: #{tpu_custom_call.1} parent=1 // pred_region
      %40 = dma.done [#allocation6], 512
    $region21: #{tpu_custom_call.1} parent=1 // pred_fallthru
      _
    %v41 = vld [vmem:[#allocation2] sm:$0xff]
    %v42 = vld [vmem:[#allocation5] sm:$0xff]
    %v43 = vld [vmem:[#allocation5 + $0x8] sm:$0xff]
    %v44 = vld [vmem:[#allocation5 + $0x10] sm:$0xff]
    %v45 = vld [vmem:[#allocation5 + $0x18] sm:$0xff]
    %v46 = vld [vmem:[%s2] sm:$0x1]
    %v48 = vlaneseq
    %v49 = vshrl.u32 %v48, 7
    %v50 = vsub.s32 0, %v49
    %v51 = vrot.slane %v46, %v50
    %vm53 = vcmask 261120
    %v55 = vsel %vm53, %v41, 0
    %57 = vmatprep.subr.mxu0 0.0
    %58 = vmatpush1.msra.mxu0 %v42
    %59 = vmatprep.subr.mxu0 0.0
    %60 = vmatpush1.msra.mxu0 %v43
    %61 = vmatprep.subr.mxu0 0.0
    %62 = vmatpush1.msra.mxu0 %v44
    %63 = vmatprep.subr.mxu0 0.0
    %64 = vmatpush1.msra.mxu0 %v45
    %65 = vmatprep.subr.mxu0 0.0
    %66 = vmatpush1.msra.mxu0 0.0
    %67 = vmatprep.subr.mxu0 0.0
    %68 = vmatpush1.msra.mxu0 0.0
    %69 = vmatprep.subr.mxu0 0.0
    %70 = vmatpush1.msra.mxu0 0.0
    %71 = vmatprep.subr.mxu0 0.0
    %72 = vmatpush1.msra.mxu0 0.0
    %73 = vmatprep.subr.mxu0 0.0
    %74 = vmatpush1.msra.mxu0 0.0
    %75 = vmatprep.subr.mxu0 0.0
    %76 = vmatpush1.msra.mxu0 0.0
    %77 = vmatprep.subr.mxu0 0.0
    %78 = vmatpush1.msra.mxu0 0.0
    %79 = vmatprep.subr.mxu0 0.0
    %80 = vmatpush1.msra.mxu0 0.0
    %81 = vmatprep.subr.mxu0 0.0
    %82 = vmatpush1.msra.mxu0 0.0
    %83 = vmatprep.subr.mxu0 0.0
    %84 = vmatpush1.msra.mxu0 0.0
    %85 = vmatprep.subr.mxu0 0.0
    %86 = vmatpush1.msra.mxu0 0.0
    %87 = vmatprep.subr.mxu0 0.0
    %88 = vmatpush1.msra.mxu0 0.0
    %89 = vmatprep.subr.mxu0 0.0
    %90 = vmatpush1.msra.mxu0 0.0
    %91 = vmatprep.subr.mxu0 0.0
    %92 = vmatpush1.msra.mxu0 0.0
    %93 = vmatprep.subr.mxu0 0.0
    %94 = vmatpush1.msra.mxu0 0.0
    %95 = vmatprep.subr.mxu0 0.0
    %96 = vmatpush1.msra.mxu0 0.0
    %97 = vmatprep.subr.mxu0 0.0
    %98 = vmatpush1.msra.mxu0 0.0
    %99 = vmatprep.subr.mxu0 0.0
    %100 = vmatpush1.msra.mxu0 0.0
    %101 = vmatprep.subr.mxu0 0.0
    %102 = vmatpush1.msra.mxu0 0.0
    %103 = vmatprep.subr.mxu0 0.0
    %104 = vmatpush1.msra.mxu0 0.0
    %105 = vmatprep.subr.mxu0 0.0
    %106 = vmatpush1.msra.mxu0 0.0
    %107 = vmatprep.subr.mxu0 0.0
    %108 = vmatpush1.msra.mxu0 0.0
    %109 = vmatprep.subr.mxu0 0.0
    %110 = vmatpush1.msra.mxu0 0.0
    %111 = vmatprep.subr.mxu0 0.0
    %112 = vmatpush1.msra.mxu0 0.0
    %113 = vmatprep.subr.mxu0 0.0
    %114 = vmatpush1.msra.mxu0 0.0
    %115 = vmatprep.subr.mxu0 0.0
    %116 = vmatpush1.msra.mxu0 0.0
    %117 = vmatprep.subr.mxu0 0.0
    %118 = vmatpush1.msra.mxu0 0.0
    %119 = vmatprep.subr.mxu0 0.0
    %120 = vmatpush1.msra.mxu0 0.0
    %121 = vmatprep.mubr.f32.mxu0 0.0
    %122 = vmatmul.mubr.f32.gmra.mrb[0].mxu0 %v55
    %v123 = vpop.f32.mrb[0].mxu0
    %v124 = vadd.f32 %v51, %v123
    %v125 = vpop.f32.mrb[0].mxu0
    %126 = vdwg.mxu0
    %v127 = vand.u32 2147483647, %v124
    %vm128 = vcmp.le.f32.partialorder %v127, 0.7853982
    %vm129 = vcmp.lt.s32.totalorder %v124, 0
    %v130 = vand.u32 %v124, 2139095040
    %v131 = vshrl.u32 %v130, 23
    %v132 = vsub.s32 %v131, 127
    %v133 = vand.u32 2147483647, %v124
    %v134 = vand.u32 %v133, 8388607
    %v135 = vor.u32 %v134, 8388608
    %v136 = vsub.s32 0, %v135
    %v137 = vadd.s32 %v132, 1
    %vm138 = vcmp.gt.s32.totalorder %v137, 0
    %v139 = vsel %vm138, %v137, 0
    %v140 = vshrl.u32 %v139, 5
    %v141 = vand.u32 %v139, 31
    %v142 = vsub.s32 32, %v141
    %v143 = vshrl.u32 683565275, %v142
    %v144 = vshll.u32 683565275, %v141
    %v145 = vshrl.u32 2475754826, %v142
    %v146 = vor.u32 %v144, %v145
    %v147 = vshll.u32 2475754826, %v141
    %v148 = vshrl.u32 2131351028, %v142
    %v149 = vor.u32 %v147, %v148
    %v150 = vshll.u32 2131351028, %v141
    %v151 = vshrl.u32 2102212464, %v142
    %v152 = vor.u32 %v150, %v151
    %v153 = vshll.u32 2102212464, %v141
    %v154 = vshrl.u32 920167782, %v142
    %v155 = vor.u32 %v153, %v154
    %v156 = vshll.u32 920167782, %v141
    %v157 = vshrl.u32 1326507024, %v142
    %v158 = vor.u32 %v156, %v157
    %vm159 = vcmp.lt.s32.totalorder %v140, 1
    %vm160 = vcmp.lt.s32.totalorder %v140, 2
    %vm161 = vcmp.lt.s32.totalorder %v140, 3
    %vm162 = vcmp.lt.s32.totalorder %v140, 4
    %v163 = vsel %vm159, %v143, %v146
    %v164 = vsel %vm162, %v152, 2102212464
    %v165 = vsel %vm161, %v149, %v164
    %v166 = vsel %vm160, %v163, %v165
    %v167 = vsel %vm159, %v146, %v149
    %v168 = vsel %vm162, %v155, 920167782
    %v169 = vsel %vm161, %v152, %v168
    %v170 = vsel %vm160, %v167, %v169
    %v171 = vsel %vm159, %v149, %v152
    %v172 = vsel %vm162, %v158, 1326507024
    %v173 = vsel %vm161, %v155, %v172
    %v174 = vsel %vm160, %v171, %v173
    %v175 = vshll.u32 %v135, 8
    %v176 = vmul.u32.u64.compose %v175, %v174
    %v177 = vextract.low.u32 %v176
    %v178 = vextract.high.u32 %v176
    %v179 = vmul.u32.u64.compose %v175, %v170
    %v180 = vextract.low.u32 %v179
    %v181 = vextract.high.u32 %v179
    %v182 = vmul.u32 %v175, %v166
    %v183 = vadd.s32 %v178, %v180
    %vm184 = vc.u32 %v178, %v180
    %v185 = vadd.s32 %v181, 1
    %v186 = vsel %vm184, %v185, %v181
    %v187 = vadd.s32 %v182, %v186
    %v188 = vadd.s32 %v187, 536870912
    %v189 = vshrl.u32 %v188, 30
    %v190 = vshll.u32 %v189, 30
    %v191 = vsub.s32 %v187, %v190
    %vm192 = vcmp.lt.s32.totalorder %v191, 0
    %v193 = vsub.s32 0, %v191
    %v194 = vsel %vm192, %v193, %v191
    %v195 = vclz %v194
    %v196 = vsub.s32 %v195, 2
    %vm197 = vcmp.gt.s32.totalorder 0, %v196
    %v198 = vsel %vm197, 0, %v196
    %v199 = vsub.s32 32, %v198
    %v200 = vshll.u32 %v191, %v198
    %v201 = vshrl.u32 %v183, %v199
    %v202 = vor.u32 %v200, %v201
    %v203 = vsub.s32 4294967266, %v198
    %v204 = vadd.s32 %v203, 127
    %v205 = vshll.u32 %v204, 23
    %v206 = vor.u32 4788187, %v205
    %v207 = vand.u32 2147483647, %v206
    %v209 = vcvt.s32.f32 %v202
    %v210 = vmul.f32 %v209, %v207
    %v211 = vxor.u32 %v210, 2147483648
    %v212 = vsel %vm129, %v211, %v210
    %v213 = vsub.s32 4, %v189
    %v214 = vsel %vm129, %v213, %v189
    %v215 = vsel %vm128, %v124, %v212
    %v216 = vsel %vm128, 0, %v214
    %v217 = vcosq.f32.pop %v215
    %v218 = vsinq.f32.pop %v215
    %vm219 = vweird.f32 %v124
    %v220 = vadd.s32 %v216, 3
    %v221 = vand.u32 %v220, 3
    %vm222 = vcmp.lt.s32.totalorder %v221, 2
    %vm223 = vcmp.eq.s32.totalorder %v221, 0
    %v224 = vxor.u32 %v218, 2147483648
    %v225 = vsel %vm223, %v217, %v224
    %vm226 = vcmp.eq.s32.totalorder %v221, 2
    %v227 = vxor.u32 %v217, 2147483648
    %v228 = vsel %vm226, %v227, %v218
    %v229 = vsel %vm222, %v225, %v228
    %v230 = vsel %vm219, nan, %v229
    %231 = vst [vmem:[#allocation7] sm:$0xff] %v230
    // Predicated region
    $region22: #{tpu_custom_call.1} parent=1 // pred_check
      _
    $region23: #{tpu_custom_call.1} parent=1 // pred_check_branch
      %233 = sbr.rel (0) target = $region25
    $region24: #{tpu_custom_call.1} parent=1 // pred_region
      %s235 = ssub.s32 128, 128
      %236 = vsyncadd [#allocation4], %s235
      %s238 = sshll.u32 [#allocation7], 4
      %s239 = int_to_ptr.vmem [resolvable:$true] %s238
      %241 = dma.vmem_to_hbm [thread:$0]  %s239, 128, %s3, [#allocation4]
    $region25: #{tpu_custom_call.1} parent=1 // pred_fallthru
      _
    // Predicated region
    $region26: #{tpu_custom_call.1} parent=1 // pred_check
      _
    $region27: #{tpu_custom_call.1} parent=1 // pred_check_branch
      %243 = sbr.rel (0) target = $region29
    $region28: #{tpu_custom_call.1} parent=1 // pred_region
      %244 = dma.done [#allocation4], 128
    $region29: #{tpu_custom_call.1} parent=1 // pred_fallthru
      _
    %245 = vsyncpa [#allocation3], 1
    %246 = vsyncpa [#allocation6], 1
    %247 = vsyncpa [#allocation4], 1

// kernel: tpu_custom_call.1
$region0: #{tpu_custom_call.1}
  #allocation0 [shape = 'u32[]', space=smem, size = 0x4, offset = 0x4, fixed_abs, tag = 'smem constant byte address 0x4 - core index']
  #allocation1 [shape = 'u32[144,128]{1,0:T(1,128)}', space=vmem, size = 0x12000, scoped, tag = 'internal scratch']
  %s0 = inlined_call_operand.hbm [shape: f32[8,32], index: 0, kind: input, shape index: {}]
  %s1 = inlined_call_operand.hbm [shape: f32[32,128], index: 1, kind: input, shape index: {}]
  %s2 = inlined_call_operand.vmem [shape: f32[1,128], index: 2, kind: input, shape index: {}]
  %s3 = inlined_call_operand.hbm [shape: f32[8,128], index: 3, kind: output, shape index: {}]
  %s4 = sld [smem:[#allocation0]]
  $region30: #{tpu_custom_call.1} parent=0
    _
  %s6 = ssub.s32 1, %s4
  %s7 = scalar_select 0, %s6, %s4
  $region1: #{tpu_custom_call.1} parent=0
    #allocation2 [shape = 'u8[4096]{0}', space=vmem, size = 0x1000, scoped, tag = 'input window, operand 0, single buffered']
    #allocation3 [shape = 's32[1]{0}', space=sflag, size = 0x4, scoped, tag = 'scoped memory for tpu_custom_call.1']
    #allocation4 [shape = 's32[1]{0}', space=sflag, size = 0x4, scoped, tag = 'scoped memory for tpu_custom_call.1']
    #allocation5 [shape = 'u8[16384]{0}', space=vmem, size = 0x4000, scoped, tag = 'input window, operand 1, single buffered']
    #allocation6 [shape = 's32[1]{0}', space=sflag, size = 0x4, scoped, tag = 'scoped memory for tpu_custom_call.1']
    #allocation7 [shape = 'u8[4096]{0}', space=vmem, size = 0x1000, scoped, tag = 'output window, operand 0, single buffered']
    %8 = vsyncpa [#allocation3], 0
    %9 = vsyncpa [#allocation6], 0
    %10 = vsyncpa [#allocation4], 0
    // Predicated region
    $region2: #{tpu_custom_call.1} parent=1 // pred_check
      _
    $region3: #{tpu_custom_call.1} parent=1 // pred_check_branch
      %12 = sbr.rel (0) target = $region5
    $region4: #{tpu_custom_call.1} parent=1 // pred_region
      %s14 = ssub.s32 128, 128
      %15 = vsyncadd [#allocation3], %s14
      %s17 = sshll.u32 [#allocation2], 4
      %s18 = int_to_ptr.vmem [resolvable:$true] %s17
      %20 = dma.hbm_to_vmem [thread:$0]  %s0, 128, %s18, [#allocation3]
    $region5: #{tpu_custom_call.1} parent=1 // pred_fallthru
      _
    // Predicated region
    $region6: #{tpu_custom_call.1} parent=1 // pred_check
      _
    $region7: #{tpu_custom_call.1} parent=1 // pred_check_branch
      %22 = sbr.rel (0) target = $region9
    $region8: #{tpu_custom_call.1} parent=1 // pred_region
      %s24 = ssub.s32 512, 512
      %25 = vsyncadd [#allocation6], %s24
      %s26 = sshll.u32 [#allocation5], 4
      %s27 = int_to_ptr.vmem [resolvable:$true] %s26
      %32 = dma.hbm_to_vmem [thread:$0]  %s1, 512, %s27, [#allocation6], 128, 128, 8
    $region9: #{tpu_custom_call.1} parent=1 // pred_fallthru
      _
    // Predicated region
    $region10: #{tpu_custom_call.1} parent=1 // pred_check
      _
    $region11: #{tpu_custom_call.1} parent=1 // pred_check_branch
      %34 = sbr.rel (0) target = $region13
    $region12: #{tpu_custom_call.1} parent=1 // pred_region
      _
    $region13: #{tpu_custom_call.1} parent=1 // pred_fallthru
      _
    // Predicated region
    $region14: #{tpu_custom_call.1} parent=1 // pred_check
      _
    $region15: #{tpu_custom_call.1} parent=1 // pred_check_branch
      %36 = sbr.rel (0) target = $region17
    $region16: #{tpu_custom_call.1} parent=1 // pred_region
      %37 = dma.done [#allocation3], 128
    $region17: #{tpu_custom_call.1} parent=1 // pred_fallthru
      _
    // Predicated region
    $region18: #{tpu_custom_call.1} parent=1 // pred_check
      _
    $region19: #{tpu_custom_call.1} parent=1 // pred_check_branch
      %39 = sbr.rel (0) target = $region21
    $region20: #{tpu_custom_call.1} parent=1 // pred_region
      %40 = dma.done [#allocation6], 512
    $region21: #{tpu_custom_call.1} parent=1 // pred_fallthru
      _
    %v41 = vld [vmem:[#allocation2] sm:$0xff]
    %v42 = vld [vmem:[#allocation5] sm:$0xff]
    %v43 = vld [vmem:[#allocation5 + $0x8] sm:$0xff]
    %v44 = vld [vmem:[#allocation5 + $0x10] sm:$0xff]
    %v45 = vld [vmem:[#allocation5 + $0x18] sm:$0xff]
    %v46 = vld [vmem:[%s2] sm:$0x1]
    %v48 = vlaneseq
    %v49 = vshrl.u32 %v48, 7
    %v50 = vsub.s32 0, %v49
    %v51 = vrot.slane %v46, %v50
    %vm53 = vcmask 261120
    %v55 = vsel %vm53, %v41, 0
    %57 = vmatprep.subr.mxu0 0.0
    %58 = vmatpush1.msra.mxu0 %v42
    %59 = vmatprep.subr.mxu0 0.0
    %60 = vmatpush1.msra.mxu0 %v43
    %61 = vmatprep.subr.mxu0 0.0
    %62 = vmatpush1.msra.mxu0 %v44
    %63 = vmatprep.subr.mxu0 0.0
    %64 = vmatpush1.msra.mxu0 %v45
    %65 = vmatprep.subr.mxu0 0.0
    %66 = vmatpush1.msra.mxu0 0.0
    %67 = vmatprep.subr.mxu0 0.0
    %68 = vmatpush1.msra.mxu0 0.0
    %69 = vmatprep.subr.mxu0 0.0
    %70 = vmatpush1.msra.mxu0 0.0
    %71 = vmatprep.subr.mxu0 0.0
    %72 = vmatpush1.msra.mxu0 0.0
    %73 = vmatprep.subr.mxu0 0.0
    %74 = vmatpush1.msra.mxu0 0.0
    %75 = vmatprep.subr.mxu0 0.0
    %76 = vmatpush1.msra.mxu0 0.0
    %77 = vmatprep.subr.mxu0 0.0
    %78 = vmatpush1.msra.mxu0 0.0
    %79 = vmatprep.subr.mxu0 0.0
    %80 = vmatpush1.msra.mxu0 0.0
    %81 = vmatprep.subr.mxu0 0.0
    %82 = vmatpush1.msra.mxu0 0.0
    %83 = vmatprep.subr.mxu0 0.0
    %84 = vmatpush1.msra.mxu0 0.0
    %85 = vmatprep.subr.mxu0 0.0
    %86 = vmatpush1.msra.mxu0 0.0
    %87 = vmatprep.subr.mxu0 0.0
    %88 = vmatpush1.msra.mxu0 0.0
    %89 = vmatprep.subr.mxu0 0.0
    %90 = vmatpush1.msra.mxu0 0.0
    %91 = vmatprep.subr.mxu0 0.0
    %92 = vmatpush1.msra.mxu0 0.0
    %93 = vmatprep.subr.mxu0 0.0
    %94 = vmatpush1.msra.mxu0 0.0
    %95 = vmatprep.subr.mxu0 0.0
    %96 = vmatpush1.msra.mxu0 0.0
    %97 = vmatprep.subr.mxu0 0.0
    %98 = vmatpush1.msra.mxu0 0.0
    %99 = vmatprep.subr.mxu0 0.0
    %100 = vmatpush1.msra.mxu0 0.0
    %101 = vmatprep.subr.mxu0 0.0
    %102 = vmatpush1.msra.mxu0 0.0
    %103 = vmatprep.subr.mxu0 0.0
    %104 = vmatpush1.msra.mxu0 0.0
    %105 = vmatprep.subr.mxu0 0.0
    %106 = vmatpush1.msra.mxu0 0.0
    %107 = vmatprep.subr.mxu0 0.0
    %108 = vmatpush1.msra.mxu0 0.0
    %109 = vmatprep.subr.mxu0 0.0
    %110 = vmatpush1.msra.mxu0 0.0
    %111 = vmatprep.subr.mxu0 0.0
    %112 = vmatpush1.msra.mxu0 0.0
    %113 = vmatprep.subr.mxu0 0.0
    %114 = vmatpush1.msra.mxu0 0.0
    %115 = vmatprep.subr.mxu0 0.0
    %116 = vmatpush1.msra.mxu0 0.0
    %117 = vmatprep.subr.mxu0 0.0
    %118 = vmatpush1.msra.mxu0 0.0
    %119 = vmatprep.subr.mxu0 0.0
    %120 = vmatpush1.msra.mxu0 0.0
    %121 = vmatprep.mubr.f32.mxu0 0.0
    %122 = vmatmul.mubr.f32.gmra.mrb[0].mxu0 %v55
    %v123 = vpop.f32.mrb[0].mxu0
    %v124 = vadd.f32 %v51, %v123
    %v125 = vpop.f32.mrb[0].mxu0
    %126 = vdwg.mxu0
    %v127 = vand.u32 2147483647, %v124
    %vm128 = vcmp.le.f32.partialorder %v127, 0.7853982
    %vm129 = vcmp.lt.s32.totalorder %v124, 0
    %v130 = vand.u32 %v124, 2139095040
    %v131 = vshrl.u32 %v130, 23
    %v132 = vsub.s32 %v131, 127
    %v133 = vand.u32 2147483647, %v124
    %v134 = vand.u32 %v133, 8388607
    %v135 = vor.u32 %v134, 8388608
    %v136 = vsub.s32 0, %v135
    %v137 = vadd.s32 %v132, 1
    %vm138 = vcmp.gt.s32.totalorder %v137, 0
    %v139 = vsel %vm138, %v137, 0
    %v140 = vshrl.u32 %v139, 5
    %v141 = vand.u32 %v139, 31
    %v142 = vsub.s32 32, %v141
    %v143 = vshrl.u32 683565275, %v142
    %v144 = vshll.u32 683565275, %v141
    %v145 = vshrl.u32 2475754826, %v142
    %v146 = vor.u32 %v144, %v145
    %v147 = vshll.u32 2475754826, %v141
    %v148 = vshrl.u32 2131351028, %v142
    %v149 = vor.u32 %v147, %v148
    %v150 = vshll.u32 2131351028, %v141
    %v151 = vshrl.u32 2102212464, %v142
    %v152 = vor.u32 %v150, %v151
    %v153 = vshll.u32 2102212464, %v141
    %v154 = vshrl.u32 920167782, %v142
    %v155 = vor.u32 %v153, %v154
    %v156 = vshll.u32 920167782, %v141
    %v157 = vshrl.u32 1326507024, %v142
    %v158 = vor.u32 %v156, %v157
    %vm159 = vcmp.lt.s32.totalorder %v140, 1
    %vm160 = vcmp.lt.s32.totalorder %v140, 2
    %vm161 = vcmp.lt.s32.totalorder %v140, 3
    %vm162 = vcmp.lt.s32.totalorder %v140, 4
    %v163 = vsel %vm159, %v143, %v146
    %v164 = vsel %vm162, %v152, 2102212464
    %v165 = vsel %vm161, %v149, %v164
    %v166 = vsel %vm160, %v163, %v165
    %v167 = vsel %vm159, %v146, %v149
    %v168 = vsel %vm162, %v155, 920167782
    %v169 = vsel %vm161, %v152, %v168
    %v170 = vsel %vm160, %v167, %v169
    %v171 = vsel %vm159, %v149, %v152
    %v172 = vsel %vm162, %v158, 1326507024
    %v173 = vsel %vm161, %v155, %v172
    %v174 = vsel %vm160, %v171, %v173
    %v175 = vshll.u32 %v135, 8
    %v176 = vmul.u32.u64.compose %v175, %v174
    %v177 = vextract.low.u32 %v176
    %v178 = vextract.high.u32 %v176
    %v179 = vmul.u32.u64.compose %v175, %v170
    %v180 = vextract.low.u32 %v179
    %v181 = vextract.high.u32 %v179
    %v182 = vmul.u32 %v175, %v166
    %v183 = vadd.s32 %v178, %v180
    %vm184 = vc.u32 %v178, %v180
    %v185 = vadd.s32 %v181, 1
    %v186 = vsel %vm184, %v185, %v181
    %v187 = vadd.s32 %v182, %v186
    %v188 = vadd.s32 %v187, 536870912
    %v189 = vshrl.u32 %v188, 30
    %v190 = vshll.u32 %v189, 30
    %v191 = vsub.s32 %v187, %v190
    %vm192 = vcmp.lt.s32.totalorder %v191, 0
    %v193 = vsub.s32 0, %v191
    %v194 = vsel %vm192, %v193, %v191
    %v195 = vclz %v194
    %v196 = vsub.s32 %v195, 2
    %vm197 = vcmp.gt.s32.totalorder 0, %v196
    %v198 = vsel %vm197, 0, %v196
    %v199 = vsub.s32 32, %v198
    %v200 = vshll.u32 %v191, %v198
    %v201 = vshrl.u32 %v183, %v199
    %v202 = vor.u32 %v200, %v201
    %v203 = vsub.s32 4294967266, %v198
    %v204 = vadd.s32 %v203, 127
    %v205 = vshll.u32 %v204, 23
    %v206 = vor.u32 4788187, %v205
    %v207 = vand.u32 2147483647, %v206
    %v209 = vcvt.s32.f32 %v202
    %v210 = vmul.f32 %v209, %v207
    %v211 = vxor.u32 %v210, 2147483648
    %v212 = vsel %vm129, %v211, %v210
    %v213 = vsub.s32 4, %v189
    %v214 = vsel %vm129, %v213, %v189
    %v215 = vsel %vm128, %v124, %v212
    %v216 = vsel %vm128, 0, %v214
    %v217 = vcosq.f32.pop %v215
    %v218 = vsinq.f32.pop %v215
    %vm219 = vweird.f32 %v124
    %v220 = vadd.s32 %v216, 3
    %v221 = vand.u32 %v220, 3
    %vm222 = vcmp.lt.s32.totalorder %v221, 2
    %vm223 = vcmp.eq.s32.totalorder %v221, 0
    %v224 = vxor.u32 %v218, 2147483648
    %v225 = vsel %vm223, %v217, %v224
    %vm226 = vcmp.eq.s32.totalorder %v221, 2
    %v227 = vxor.u32 %v217, 2147483648
    %v228 = vsel %vm226, %v227, %v218
    %v229 = vsel %vm222, %v225, %v228
    %v230 = vsel %vm219, nan, %v229
    %231 = vst [vmem:[#allocation7] sm:$0xff] %v230
    // Predicated region
    $region22: #{tpu_custom_call.1} parent=1 // pred_check
      _
    $region23: #{tpu_custom_call.1} parent=1 // pred_check_branch
      %233 = sbr.rel (0) target = $region25
    $region24: #{tpu_custom_call.1} parent=1 // pred_region
      %s235 = ssub.s32 128, 128
      %236 = vsyncadd [#allocation4], %s235
      %s238 = sshll.u32 [#allocation7], 4
      %s239 = int_to_ptr.vmem [resolvable:$true] %s238
      %241 = dma.vmem_to_hbm [thread:$0]  %s239, 128, %s3, [#allocation4]
    $region25: #{tpu_custom_call.1} parent=1 // pred_fallthru
      _
    // Predicated region
    $region26: #{tpu_custom_call.1} parent=1 // pred_check
      _
    $region27: #{tpu_custom_call.1} parent=1 // pred_check_branch
      %243 = sbr.rel (0) target = $region29
    $region28: #{tpu_custom_call.1} parent=1 // pred_region
      %244 = dma.done [#allocation4], 128
    $region29: #{tpu_custom_call.1} parent=1 // pred_fallthru
      _
    %245 = vsyncpa [#allocation3], 1
    %246 = vsyncpa [#allocation6], 1
    %247 = vsyncpa [#allocation4], 1

</llo_original>
